<compile_context>
chip_gen: v6e
topology: v6e:2x2x1
jax: 0.10.0
libtpu: 0.0.40
codegen_flags: <defaults>
</compile_context>

<pallas_src>
import jax
import jax.numpy as jnp
from jax.experimental import pallas as pl
from jax.experimental.pallas import tpu as pltpu

EPS = 1e-5


def block_kernel(xp_ref, scale_ref, shift_ref, w1_ref, b1_ref, w2_ref, b2_ref, o_ref):
    # xp_ref      : (1, Cin, L+2) replicate-padded raw input (one sample), L on lanes
    # scale/shift : (Cin, 1)      folded BatchNorm per-channel affine
    # w1_ref      : (Cout, Cin*3) conv1 weights, column index = ci*3 + k
    # b1_ref      : (Cout, 1)
    # w2_ref      : (Cout, Cout*3) conv2 weights, column index = ci*3 + k
    # b2_ref      : (Cout, 1)
    # o_ref       : (1, Cout, L)
    cout = o_ref.shape[1]
    L = o_ref.shape[2]

    xp = xp_ref[0]                                          # (Cin, L+2)
    xn = xp * scale_ref[...] + shift_ref[...]               # folded BatchNorm: one FMA

    def conv3_relu(taps, w2d, b):
        # taps: 3 x (cin, L); w2d: (cout, cin*3); b: (cout, 1)
        cin = taps[0].shape[0]
        acc = jnp.broadcast_to(b, (cout, L))                # bias folded into the init
        for ci in range(cin):                               # static unroll: VPU FMAs
            for k in range(3):
                col = w2d[:, ci * 3 + k: ci * 3 + k + 1]    # (cout, 1)
                acc = acc + col * taps[k][ci:ci + 1, :]     # (cout,1)*(1,L) -> (cout,L)
        return jnp.maximum(acc, 0.0)

    # conv1: taps are static lane-shifted slices of the padded slab (no concatenates).
    h1 = conv3_relu([xn[:, k:k + L] for k in range(3)], w1_ref[...], b1_ref[...])

    # conv2: PyTorch replicate padding acts on the *length-L* ReLU(conv1) output, so the
    # clamp must use h1's true edges (one small edge concat, not a full-size copy per tap).
    h1p = jnp.concatenate([h1[:, :1], h1, h1[:, L - 1:L]], axis=1)   # (cout, L+2)
    h2 = conv3_relu([h1p[:, k:k + L] for k in range(3)], w2_ref[...], b2_ref[...])

    o_ref[0] = h2.astype(o_ref.dtype)


@jax.jit
def block_forward(x_ncl, gamma, beta, w1, b1, w2, b2):
    """x_ncl: (N, Cin, L); w1: (Cout, Cin, 3); w2: (Cout, Cout, 3) -- PyTorch layouts."""
    x = x_ncl.astype(jnp.float32)
    N, Cin, L = x.shape
    Cout = w1.shape[0]
    Lp = L + 2

    # BatchNorm1d training-mode batch statistics (global over N and L, biased variance),
    # folded into a per-channel scale/shift in XLA (one cheap reduction pass).
    mean = jnp.mean(x, axis=(0, 2))                                   # (Cin,)
    var = jnp.mean(jnp.square(x - mean[None, :, None]), axis=(0, 2))  # biased
    scale = gamma.astype(jnp.float32) * jax.lax.rsqrt(var + EPS)      # (Cin,)
    shift = beta.astype(jnp.float32) - mean * scale                   # (Cin,)

    # Replicate-pad raw x by 1 along L; per-channel affine commutes with edge replication,
    # so this is identical to padding BN(x).
    xp = jnp.pad(x, ((0, 0), (0, 0), (1, 1)), mode="edge")            # (N, Cin, L+2)

    w1_2d = w1.reshape(Cout, Cin * 3).astype(jnp.float32)             # col = ci*3 + k
    w2_2d = w2.reshape(Cout, Cout * 3).astype(jnp.float32)

    return pl.pallas_call(
        block_kernel,
        out_shape=jax.ShapeDtypeStruct((N, Cout, L), jnp.float32),
        grid_spec=pltpu.PrefetchScalarGridSpec(
            num_scalar_prefetch=0,
            grid=(N,),
            in_specs=[
                pl.BlockSpec((1, Cin, Lp), lambda n: (n, 0, 0)),       # per-sample x tile
                pl.BlockSpec((Cin, 1), lambda n: (0, 0)),              # BN scale (resident)
                pl.BlockSpec((Cin, 1), lambda n: (0, 0)),              # BN shift
                pl.BlockSpec((Cout, Cin * 3), lambda n: (0, 0)),       # w1
                pl.BlockSpec((Cout, 1), lambda n: (0, 0)),             # b1
                pl.BlockSpec((Cout, Cout * 3), lambda n: (0, 0)),      # w2
                pl.BlockSpec((Cout, 1), lambda n: (0, 0)),             # b2
            ],
            out_specs=pl.BlockSpec((1, Cout, L), lambda n: (n, 0, 0)),
        ),
        compiler_params=pltpu.CompilerParams(
            dimension_semantics=("parallel",)),                        # megacore on v7x
    )(
        xp,
        scale.reshape(Cin, 1),
        shift.reshape(Cin, 1),
        w1_2d,
        b1.reshape(Cout, 1).astype(jnp.float32),
        w2_2d,
        b2.reshape(Cout, 1).astype(jnp.float32),
    )


# ---------------- pure-JAX reference for correctness check ----------------
def block_reference(x_ncl, gamma, beta, w1, b1, w2, b2):
    x = x_ncl.astype(jnp.float32)
    mean = jnp.mean(x, axis=(0, 2), keepdims=True)
    var = jnp.mean((x - mean) ** 2, axis=(0, 2), keepdims=True)
    xn = (x - mean) / jnp.sqrt(var + EPS)
    xn = xn * gamma.reshape(1, -1, 1) + beta.reshape(1, -1, 1)

    def conv(h, w, b):
        hp = jnp.pad(h, ((0, 0), (0, 0), (1, 1)), mode="edge")
        y = jax.lax.conv_general_dilated(
            hp, w, window_strides=(1,), padding="VALID",
            dimension_numbers=("NCH", "OIH", "NCH"))
        return y + b.reshape(1, -1, 1)

    h1 = jax.nn.relu(conv(xn, w1, b1))
    h2 = jax.nn.relu(conv(h1, w2, b2))
    return h2


if __name__ == "__main__":
    N, IN_CH, OUT_CH, L = 2, 4, 8, 16

    key = jax.random.PRNGKey(0)
    kx, kg, kb, kw1, kb1, kw2, kb2 = jax.random.split(key, 7)

    x = jax.random.normal(kx, (N, IN_CH, L), dtype=jnp.float32)
    # BatchNorm1d affine params (PyTorch default is gamma=1, beta=0; randomize to
    # exercise the affine path deterministically)
    gamma = 1.0 + 0.1 * jax.random.normal(kg, (IN_CH,), dtype=jnp.float32)
    beta = 0.1 * jax.random.normal(kb, (IN_CH,), dtype=jnp.float32)
    # Conv1d weights, PyTorch layout (out_ch, in_ch, kernel=3)
    w1 = 0.2 * jax.random.normal(kw1, (OUT_CH, IN_CH, 3), dtype=jnp.float32)
    b1 = 0.1 * jax.random.normal(kb1, (OUT_CH,), dtype=jnp.float32)
    w2 = 0.2 * jax.random.normal(kw2, (OUT_CH, OUT_CH, 3), dtype=jnp.float32)
    b2 = 0.1 * jax.random.normal(kb2, (OUT_CH,), dtype=jnp.float32)

    out = block_forward(x, gamma, beta, w1, b1, w2, b2)
    out = jax.block_until_ready(out)

    ref = block_reference(x, gamma, beta, w1, b1, w2, b2)
    assert out.shape == (N, OUT_CH, L), out.shape
    assert jnp.allclose(out, ref, atol=1e-4, rtol=1e-4), float(jnp.max(jnp.abs(out - ref)))

    print("KERNEL_OK")
</pallas_src>

<mosaic_0001>
module attributes {stable_mosaic.version = 11 : i64} {
  func.func @block_kernel(%arg0: i32, %arg1: memref<1x4x18xf32, #tpu.memory_space<vmem>>, %arg2: memref<4x1xf32, #tpu.memory_space<vmem>>, %arg3: memref<4x1xf32, #tpu.memory_space<vmem>>, %arg4: memref<8x12xf32, #tpu.memory_space<vmem>>, %arg5: memref<8x1xf32, #tpu.memory_space<vmem>>, %arg6: memref<8x24xf32, #tpu.memory_space<vmem>>, %arg7: memref<8x1xf32, #tpu.memory_space<vmem>>, %arg8: memref<1x8x16xf32, #tpu.memory_space<vmem>>) attributes {dimension_semantics = [#tpu.dimension_semantics<parallel>], iteration_bounds = array<i64: 2>, scalar_prefetch = 0 : i64, scratch_operands = 0 : i64, tpu.core_type = #tpu.core_type<tc>, window_params = [{transform_indices = @transform_0, window_bounds = array<i64: 1, 4, 18>}, {pipeline_mode = #tpu.pipeline_mode<synchronous>, transform_indices = @transform_1, window_bounds = array<i64: 4, 1>}, {pipeline_mode = #tpu.pipeline_mode<synchronous>, transform_indices = @transform_2, window_bounds = array<i64: 4, 1>}, {pipeline_mode = #tpu.pipeline_mode<synchronous>, transform_indices = @transform_3, window_bounds = array<i64: 8, 12>}, {pipeline_mode = #tpu.pipeline_mode<synchronous>, transform_indices = @transform_4, window_bounds = array<i64: 8, 1>}, {pipeline_mode = #tpu.pipeline_mode<synchronous>, transform_indices = @transform_5, window_bounds = array<i64: 8, 24>}, {pipeline_mode = #tpu.pipeline_mode<synchronous>, transform_indices = @transform_6, window_bounds = array<i64: 8, 1>}, {transform_indices = @transform_7, window_bounds = array<i64: 1, 8, 16>}]} {
    %c0 = arith.constant 0 : index
    %c0_0 = arith.constant 0 : index
    %c0_1 = arith.constant 0 : index
    %0 = vector.load %arg1[%c0, %c0_0, %c0_1] : memref<1x4x18xf32, #tpu.memory_space<vmem>>, vector<1x4x18xf32>
    %1 = vector.shape_cast %0 : vector<1x4x18xf32> to vector<4x18xf32>
    %c0_2 = arith.constant 0 : index
    %c0_3 = arith.constant 0 : index
    %2 = vector.load %arg2[%c0_2, %c0_3] : memref<4x1xf32, #tpu.memory_space<vmem>>, vector<4x1xf32>
    %3 = vector.broadcast %2 : vector<4x1xf32> to vector<4x18xf32>
    %4 = arith.mulf %1, %3 : vector<4x18xf32>
    %c0_4 = arith.constant 0 : index
    %c0_5 = arith.constant 0 : index
    %5 = vector.load %arg3[%c0_4, %c0_5] : memref<4x1xf32, #tpu.memory_space<vmem>>, vector<4x1xf32>
    %6 = vector.broadcast %5 : vector<4x1xf32> to vector<4x18xf32>
    %7 = arith.addf %4, %6 : vector<4x18xf32>
    %8 = vector.extract_strided_slice %7 {offsets = [0, 0], sizes = [4, 16], strides = [1, 1]} : vector<4x18xf32> to vector<4x16xf32>
    %9 = vector.extract_strided_slice %7 {offsets = [0, 1], sizes = [4, 16], strides = [1, 1]} : vector<4x18xf32> to vector<4x16xf32>
    %10 = vector.extract_strided_slice %7 {offsets = [0, 2], sizes = [4, 16], strides = [1, 1]} : vector<4x18xf32> to vector<4x16xf32>
    %c0_6 = arith.constant 0 : index
    %c0_7 = arith.constant 0 : index
    %11 = vector.load %arg4[%c0_6, %c0_7] : memref<8x12xf32, #tpu.memory_space<vmem>>, vector<8x12xf32>
    %c0_8 = arith.constant 0 : index
    %c0_9 = arith.constant 0 : index
    %12 = vector.load %arg5[%c0_8, %c0_9] : memref<8x1xf32, #tpu.memory_space<vmem>>, vector<8x1xf32>
    %13 = vector.shape_cast %12 : vector<8x1xf32> to vector<8x1xf32>
    %14 = vector.broadcast %13 : vector<8x1xf32> to vector<8x16xf32>
    %15 = vector.extract_strided_slice %11 {offsets = [0, 0], sizes = [8, 1], strides = [1, 1]} : vector<8x12xf32> to vector<8x1xf32>
    %16 = vector.extract_strided_slice %8 {offsets = [0, 0], sizes = [1, 16], strides = [1, 1]} : vector<4x16xf32> to vector<1x16xf32>
    %17 = vector.broadcast %15 : vector<8x1xf32> to vector<8x16xf32>
    %18 = vector.broadcast %16 : vector<1x16xf32> to vector<8x16xf32>
    %19 = arith.mulf %17, %18 : vector<8x16xf32>
    %20 = arith.addf %14, %19 : vector<8x16xf32>
    %21 = vector.extract_strided_slice %11 {offsets = [0, 1], sizes = [8, 1], strides = [1, 1]} : vector<8x12xf32> to vector<8x1xf32>
    %22 = vector.extract_strided_slice %9 {offsets = [0, 0], sizes = [1, 16], strides = [1, 1]} : vector<4x16xf32> to vector<1x16xf32>
    %23 = vector.broadcast %21 : vector<8x1xf32> to vector<8x16xf32>
    %24 = vector.broadcast %22 : vector<1x16xf32> to vector<8x16xf32>
    %25 = arith.mulf %23, %24 : vector<8x16xf32>
    %26 = arith.addf %20, %25 : vector<8x16xf32>
    %27 = vector.extract_strided_slice %11 {offsets = [0, 2], sizes = [8, 1], strides = [1, 1]} : vector<8x12xf32> to vector<8x1xf32>
    %28 = vector.extract_strided_slice %10 {offsets = [0, 0], sizes = [1, 16], strides = [1, 1]} : vector<4x16xf32> to vector<1x16xf32>
    %29 = vector.broadcast %27 : vector<8x1xf32> to vector<8x16xf32>
    %30 = vector.broadcast %28 : vector<1x16xf32> to vector<8x16xf32>
    %31 = arith.mulf %29, %30 : vector<8x16xf32>
    %32 = arith.addf %26, %31 : vector<8x16xf32>
    %33 = vector.extract_strided_slice %11 {offsets = [0, 3], sizes = [8, 1], strides = [1, 1]} : vector<8x12xf32> to vector<8x1xf32>
    %34 = vector.extract_strided_slice %8 {offsets = [1, 0], sizes = [1, 16], strides = [1, 1]} : vector<4x16xf32> to vector<1x16xf32>
    %35 = vector.broadcast %33 : vector<8x1xf32> to vector<8x16xf32>
    %36 = vector.broadcast %34 : vector<1x16xf32> to vector<8x16xf32>
    %37 = arith.mulf %35, %36 : vector<8x16xf32>
    %38 = arith.addf %32, %37 : vector<8x16xf32>
    %39 = vector.extract_strided_slice %11 {offsets = [0, 4], sizes = [8, 1], strides = [1, 1]} : vector<8x12xf32> to vector<8x1xf32>
    %40 = vector.extract_strided_slice %9 {offsets = [1, 0], sizes = [1, 16], strides = [1, 1]} : vector<4x16xf32> to vector<1x16xf32>
    %41 = vector.broadcast %39 : vector<8x1xf32> to vector<8x16xf32>
    %42 = vector.broadcast %40 : vector<1x16xf32> to vector<8x16xf32>
    %43 = arith.mulf %41, %42 : vector<8x16xf32>
    %44 = arith.addf %38, %43 : vector<8x16xf32>
    %45 = vector.extract_strided_slice %11 {offsets = [0, 5], sizes = [8, 1], strides = [1, 1]} : vector<8x12xf32> to vector<8x1xf32>
    %46 = vector.extract_strided_slice %10 {offsets = [1, 0], sizes = [1, 16], strides = [1, 1]} : vector<4x16xf32> to vector<1x16xf32>
    %47 = vector.broadcast %45 : vector<8x1xf32> to vector<8x16xf32>
    %48 = vector.broadcast %46 : vector<1x16xf32> to vector<8x16xf32>
    %49 = arith.mulf %47, %48 : vector<8x16xf32>
    %50 = arith.addf %44, %49 : vector<8x16xf32>
    %51 = vector.extract_strided_slice %11 {offsets = [0, 6], sizes = [8, 1], strides = [1, 1]} : vector<8x12xf32> to vector<8x1xf32>
    %52 = vector.extract_strided_slice %8 {offsets = [2, 0], sizes = [1, 16], strides = [1, 1]} : vector<4x16xf32> to vector<1x16xf32>
    %53 = vector.broadcast %51 : vector<8x1xf32> to vector<8x16xf32>
    %54 = vector.broadcast %52 : vector<1x16xf32> to vector<8x16xf32>
    %55 = arith.mulf %53, %54 : vector<8x16xf32>
    %56 = arith.addf %50, %55 : vector<8x16xf32>
    %57 = vector.extract_strided_slice %11 {offsets = [0, 7], sizes = [8, 1], strides = [1, 1]} : vector<8x12xf32> to vector<8x1xf32>
    %58 = vector.extract_strided_slice %9 {offsets = [2, 0], sizes = [1, 16], strides = [1, 1]} : vector<4x16xf32> to vector<1x16xf32>
    %59 = vector.broadcast %57 : vector<8x1xf32> to vector<8x16xf32>
    %60 = vector.broadcast %58 : vector<1x16xf32> to vector<8x16xf32>
    %61 = arith.mulf %59, %60 : vector<8x16xf32>
    %62 = arith.addf %56, %61 : vector<8x16xf32>
    %63 = vector.extract_strided_slice %11 {offsets = [0, 8], sizes = [8, 1], strides = [1, 1]} : vector<8x12xf32> to vector<8x1xf32>
    %64 = vector.extract_strided_slice %10 {offsets = [2, 0], sizes = [1, 16], strides = [1, 1]} : vector<4x16xf32> to vector<1x16xf32>
    %65 = vector.broadcast %63 : vector<8x1xf32> to vector<8x16xf32>
    %66 = vector.broadcast %64 : vector<1x16xf32> to vector<8x16xf32>
    %67 = arith.mulf %65, %66 : vector<8x16xf32>
    %68 = arith.addf %62, %67 : vector<8x16xf32>
    %69 = vector.extract_strided_slice %11 {offsets = [0, 9], sizes = [8, 1], strides = [1, 1]} : vector<8x12xf32> to vector<8x1xf32>
    %70 = vector.extract_strided_slice %8 {offsets = [3, 0], sizes = [1, 16], strides = [1, 1]} : vector<4x16xf32> to vector<1x16xf32>
    %71 = vector.broadcast %69 : vector<8x1xf32> to vector<8x16xf32>
    %72 = vector.broadcast %70 : vector<1x16xf32> to vector<8x16xf32>
    %73 = arith.mulf %71, %72 : vector<8x16xf32>
    %74 = arith.addf %68, %73 : vector<8x16xf32>
    %75 = vector.extract_strided_slice %11 {offsets = [0, 10], sizes = [8, 1], strides = [1, 1]} : vector<8x12xf32> to vector<8x1xf32>
    %76 = vector.extract_strided_slice %9 {offsets = [3, 0], sizes = [1, 16], strides = [1, 1]} : vector<4x16xf32> to vector<1x16xf32>
    %77 = vector.broadcast %75 : vector<8x1xf32> to vector<8x16xf32>
    %78 = vector.broadcast %76 : vector<1x16xf32> to vector<8x16xf32>
    %79 = arith.mulf %77, %78 : vector<8x16xf32>
    %80 = arith.addf %74, %79 : vector<8x16xf32>
    %81 = vector.extract_strided_slice %11 {offsets = [0, 11], sizes = [8, 1], strides = [1, 1]} : vector<8x12xf32> to vector<8x1xf32>
    %82 = vector.extract_strided_slice %10 {offsets = [3, 0], sizes = [1, 16], strides = [1, 1]} : vector<4x16xf32> to vector<1x16xf32>
    %83 = vector.broadcast %81 : vector<8x1xf32> to vector<8x16xf32>
    %84 = vector.broadcast %82 : vector<1x16xf32> to vector<8x16xf32>
    %85 = arith.mulf %83, %84 : vector<8x16xf32>
    %86 = arith.addf %80, %85 : vector<8x16xf32>
    %cst = arith.constant 0.000000e+00 : f32
    %87 = vector.broadcast %cst : f32 to vector<8x16xf32>
    %88 = arith.maximumf %86, %87 : vector<8x16xf32>
    %89 = vector.extract_strided_slice %88 {offsets = [0, 0], sizes = [8, 1], strides = [1, 1]} : vector<8x16xf32> to vector<8x1xf32>
    %90 = vector.extract_strided_slice %88 {offsets = [0, 15], sizes = [8, 1], strides = [1, 1]} : vector<8x16xf32> to vector<8x1xf32>
    %91 = tpu.concatenate %89, %88, %90 in 1 : vector<8x1xf32>, vector<8x16xf32>, vector<8x1xf32> -> vector<8x18xf32>
    %92 = vector.extract_strided_slice %91 {offsets = [0, 0], sizes = [8, 16], strides = [1, 1]} : vector<8x18xf32> to vector<8x16xf32>
    %93 = vector.extract_strided_slice %91 {offsets = [0, 1], sizes = [8, 16], strides = [1, 1]} : vector<8x18xf32> to vector<8x16xf32>
    %94 = vector.extract_strided_slice %91 {offsets = [0, 2], sizes = [8, 16], strides = [1, 1]} : vector<8x18xf32> to vector<8x16xf32>
    %c0_10 = arith.constant 0 : index
    %c0_11 = arith.constant 0 : index
    %95 = vector.load %arg6[%c0_10, %c0_11] : memref<8x24xf32, #tpu.memory_space<vmem>>, vector<8x24xf32>
    %c0_12 = arith.constant 0 : index
    %c0_13 = arith.constant 0 : index
    %96 = vector.load %arg7[%c0_12, %c0_13] : memref<8x1xf32, #tpu.memory_space<vmem>>, vector<8x1xf32>
    %97 = vector.shape_cast %96 : vector<8x1xf32> to vector<8x1xf32>
    %98 = vector.broadcast %97 : vector<8x1xf32> to vector<8x16xf32>
    %99 = vector.extract_strided_slice %95 {offsets = [0, 0], sizes = [8, 1], strides = [1, 1]} : vector<8x24xf32> to vector<8x1xf32>
    %100 = vector.extract_strided_slice %92 {offsets = [0, 0], sizes = [1, 16], strides = [1, 1]} : vector<8x16xf32> to vector<1x16xf32>
    %101 = vector.broadcast %99 : vector<8x1xf32> to vector<8x16xf32>
    %102 = vector.broadcast %100 : vector<1x16xf32> to vector<8x16xf32>
    %103 = arith.mulf %101, %102 : vector<8x16xf32>
    %104 = arith.addf %98, %103 : vector<8x16xf32>
    %105 = vector.extract_strided_slice %95 {offsets = [0, 1], sizes = [8, 1], strides = [1, 1]} : vector<8x24xf32> to vector<8x1xf32>
    %106 = vector.extract_strided_slice %93 {offsets = [0, 0], sizes = [1, 16], strides = [1, 1]} : vector<8x16xf32> to vector<1x16xf32>
    %107 = vector.broadcast %105 : vector<8x1xf32> to vector<8x16xf32>
    %108 = vector.broadcast %106 : vector<1x16xf32> to vector<8x16xf32>
    %109 = arith.mulf %107, %108 : vector<8x16xf32>
    %110 = arith.addf %104, %109 : vector<8x16xf32>
    %111 = vector.extract_strided_slice %95 {offsets = [0, 2], sizes = [8, 1], strides = [1, 1]} : vector<8x24xf32> to vector<8x1xf32>
    %112 = vector.extract_strided_slice %94 {offsets = [0, 0], sizes = [1, 16], strides = [1, 1]} : vector<8x16xf32> to vector<1x16xf32>
    %113 = vector.broadcast %111 : vector<8x1xf32> to vector<8x16xf32>
    %114 = vector.broadcast %112 : vector<1x16xf32> to vector<8x16xf32>
    %115 = arith.mulf %113, %114 : vector<8x16xf32>
    %116 = arith.addf %110, %115 : vector<8x16xf32>
    %117 = vector.extract_strided_slice %95 {offsets = [0, 3], sizes = [8, 1], strides = [1, 1]} : vector<8x24xf32> to vector<8x1xf32>
    %118 = vector.extract_strided_slice %92 {offsets = [1, 0], sizes = [1, 16], strides = [1, 1]} : vector<8x16xf32> to vector<1x16xf32>
    %119 = vector.broadcast %117 : vector<8x1xf32> to vector<8x16xf32>
    %120 = vector.broadcast %118 : vector<1x16xf32> to vector<8x16xf32>
    %121 = arith.mulf %119, %120 : vector<8x16xf32>
    %122 = arith.addf %116, %121 : vector<8x16xf32>
    %123 = vector.extract_strided_slice %95 {offsets = [0, 4], sizes = [8, 1], strides = [1, 1]} : vector<8x24xf32> to vector<8x1xf32>
    %124 = vector.extract_strided_slice %93 {offsets = [1, 0], sizes = [1, 16], strides = [1, 1]} : vector<8x16xf32> to vector<1x16xf32>
    %125 = vector.broadcast %123 : vector<8x1xf32> to vector<8x16xf32>
    %126 = vector.broadcast %124 : vector<1x16xf32> to vector<8x16xf32>
    %127 = arith.mulf %125, %126 : vector<8x16xf32>
    %128 = arith.addf %122, %127 : vector<8x16xf32>
    %129 = vector.extract_strided_slice %95 {offsets = [0, 5], sizes = [8, 1], strides = [1, 1]} : vector<8x24xf32> to vector<8x1xf32>
    %130 = vector.extract_strided_slice %94 {offsets = [1, 0], sizes = [1, 16], strides = [1, 1]} : vector<8x16xf32> to vector<1x16xf32>
    %131 = vector.broadcast %129 : vector<8x1xf32> to vector<8x16xf32>
    %132 = vector.broadcast %130 : vector<1x16xf32> to vector<8x16xf32>
    %133 = arith.mulf %131, %132 : vector<8x16xf32>
    %134 = arith.addf %128, %133 : vector<8x16xf32>
    %135 = vector.extract_strided_slice %95 {offsets = [0, 6], sizes = [8, 1], strides = [1, 1]} : vector<8x24xf32> to vector<8x1xf32>
    %136 = vector.extract_strided_slice %92 {offsets = [2, 0], sizes = [1, 16], strides = [1, 1]} : vector<8x16xf32> to vector<1x16xf32>
    %137 = vector.broadcast %135 : vector<8x1xf32> to vector<8x16xf32>
    %138 = vector.broadcast %136 : vector<1x16xf32> to vector<8x16xf32>
    %139 = arith.mulf %137, %138 : vector<8x16xf32>
    %140 = arith.addf %134, %139 : vector<8x16xf32>
    %141 = vector.extract_strided_slice %95 {offsets = [0, 7], sizes = [8, 1], strides = [1, 1]} : vector<8x24xf32> to vector<8x1xf32>
    %142 = vector.extract_strided_slice %93 {offsets = [2, 0], sizes = [1, 16], strides = [1, 1]} : vector<8x16xf32> to vector<1x16xf32>
    %143 = vector.broadcast %141 : vector<8x1xf32> to vector<8x16xf32>
    %144 = vector.broadcast %142 : vector<1x16xf32> to vector<8x16xf32>
    %145 = arith.mulf %143, %144 : vector<8x16xf32>
    %146 = arith.addf %140, %145 : vector<8x16xf32>
    %147 = vector.extract_strided_slice %95 {offsets = [0, 8], sizes = [8, 1], strides = [1, 1]} : vector<8x24xf32> to vector<8x1xf32>
    %148 = vector.extract_strided_slice %94 {offsets = [2, 0], sizes = [1, 16], strides = [1, 1]} : vector<8x16xf32> to vector<1x16xf32>
    %149 = vector.broadcast %147 : vector<8x1xf32> to vector<8x16xf32>
    %150 = vector.broadcast %148 : vector<1x16xf32> to vector<8x16xf32>
    %151 = arith.mulf %149, %150 : vector<8x16xf32>
    %152 = arith.addf %146, %151 : vector<8x16xf32>
    %153 = vector.extract_strided_slice %95 {offsets = [0, 9], sizes = [8, 1], strides = [1, 1]} : vector<8x24xf32> to vector<8x1xf32>
    %154 = vector.extract_strided_slice %92 {offsets = [3, 0], sizes = [1, 16], strides = [1, 1]} : vector<8x16xf32> to vector<1x16xf32>
    %155 = vector.broadcast %153 : vector<8x1xf32> to vector<8x16xf32>
    %156 = vector.broadcast %154 : vector<1x16xf32> to vector<8x16xf32>
    %157 = arith.mulf %155, %156 : vector<8x16xf32>
    %158 = arith.addf %152, %157 : vector<8x16xf32>
    %159 = vector.extract_strided_slice %95 {offsets = [0, 10], sizes = [8, 1], strides = [1, 1]} : vector<8x24xf32> to vector<8x1xf32>
    %160 = vector.extract_strided_slice %93 {offsets = [3, 0], sizes = [1, 16], strides = [1, 1]} : vector<8x16xf32> to vector<1x16xf32>
    %161 = vector.broadcast %159 : vector<8x1xf32> to vector<8x16xf32>
    %162 = vector.broadcast %160 : vector<1x16xf32> to vector<8x16xf32>
    %163 = arith.mulf %161, %162 : vector<8x16xf32>
    %164 = arith.addf %158, %163 : vector<8x16xf32>
    %165 = vector.extract_strided_slice %95 {offsets = [0, 11], sizes = [8, 1], strides = [1, 1]} : vector<8x24xf32> to vector<8x1xf32>
    %166 = vector.extract_strided_slice %94 {offsets = [3, 0], sizes = [1, 16], strides = [1, 1]} : vector<8x16xf32> to vector<1x16xf32>
    %167 = vector.broadcast %165 : vector<8x1xf32> to vector<8x16xf32>
    %168 = vector.broadcast %166 : vector<1x16xf32> to vector<8x16xf32>
    %169 = arith.mulf %167, %168 : vector<8x16xf32>
    %170 = arith.addf %164, %169 : vector<8x16xf32>
    %171 = vector.extract_strided_slice %95 {offsets = [0, 12], sizes = [8, 1], strides = [1, 1]} : vector<8x24xf32> to vector<8x1xf32>
    %172 = vector.extract_strided_slice %92 {offsets = [4, 0], sizes = [1, 16], strides = [1, 1]} : vector<8x16xf32> to vector<1x16xf32>
    %173 = vector.broadcast %171 : vector<8x1xf32> to vector<8x16xf32>
    %174 = vector.broadcast %172 : vector<1x16xf32> to vector<8x16xf32>
    %175 = arith.mulf %173, %174 : vector<8x16xf32>
    %176 = arith.addf %170, %175 : vector<8x16xf32>
    %177 = vector.extract_strided_slice %95 {offsets = [0, 13], sizes = [8, 1], strides = [1, 1]} : vector<8x24xf32> to vector<8x1xf32>
    %178 = vector.extract_strided_slice %93 {offsets = [4, 0], sizes = [1, 16], strides = [1, 1]} : vector<8x16xf32> to vector<1x16xf32>
    %179 = vector.broadcast %177 : vector<8x1xf32> to vector<8x16xf32>
    %180 = vector.broadcast %178 : vector<1x16xf32> to vector<8x16xf32>
    %181 = arith.mulf %179, %180 : vector<8x16xf32>
    %182 = arith.addf %176, %181 : vector<8x16xf32>
    %183 = vector.extract_strided_slice %95 {offsets = [0, 14], sizes = [8, 1], strides = [1, 1]} : vector<8x24xf32> to vector<8x1xf32>
    %184 = vector.extract_strided_slice %94 {offsets = [4, 0], sizes = [1, 16], strides = [1, 1]} : vector<8x16xf32> to vector<1x16xf32>
    %185 = vector.broadcast %183 : vector<8x1xf32> to vector<8x16xf32>
    %186 = vector.broadcast %184 : vector<1x16xf32> to vector<8x16xf32>
    %187 = arith.mulf %185, %186 : vector<8x16xf32>
    %188 = arith.addf %182, %187 : vector<8x16xf32>
    %189 = vector.extract_strided_slice %95 {offsets = [0, 15], sizes = [8, 1], strides = [1, 1]} : vector<8x24xf32> to vector<8x1xf32>
    %190 = vector.extract_strided_slice %92 {offsets = [5, 0], sizes = [1, 16], strides = [1, 1]} : vector<8x16xf32> to vector<1x16xf32>
    %191 = vector.broadcast %189 : vector<8x1xf32> to vector<8x16xf32>
    %192 = vector.broadcast %190 : vector<1x16xf32> to vector<8x16xf32>
    %193 = arith.mulf %191, %192 : vector<8x16xf32>
    %194 = arith.addf %188, %193 : vector<8x16xf32>
    %195 = vector.extract_strided_slice %95 {offsets = [0, 16], sizes = [8, 1], strides = [1, 1]} : vector<8x24xf32> to vector<8x1xf32>
    %196 = vector.extract_strided_slice %93 {offsets = [5, 0], sizes = [1, 16], strides = [1, 1]} : vector<8x16xf32> to vector<1x16xf32>
    %197 = vector.broadcast %195 : vector<8x1xf32> to vector<8x16xf32>
    %198 = vector.broadcast %196 : vector<1x16xf32> to vector<8x16xf32>
    %199 = arith.mulf %197, %198 : vector<8x16xf32>
    %200 = arith.addf %194, %199 : vector<8x16xf32>
    %201 = vector.extract_strided_slice %95 {offsets = [0, 17], sizes = [8, 1], strides = [1, 1]} : vector<8x24xf32> to vector<8x1xf32>
    %202 = vector.extract_strided_slice %94 {offsets = [5, 0], sizes = [1, 16], strides = [1, 1]} : vector<8x16xf32> to vector<1x16xf32>
    %203 = vector.broadcast %201 : vector<8x1xf32> to vector<8x16xf32>
    %204 = vector.broadcast %202 : vector<1x16xf32> to vector<8x16xf32>
    %205 = arith.mulf %203, %204 : vector<8x16xf32>
    %206 = arith.addf %200, %205 : vector<8x16xf32>
    %207 = vector.extract_strided_slice %95 {offsets = [0, 18], sizes = [8, 1], strides = [1, 1]} : vector<8x24xf32> to vector<8x1xf32>
    %208 = vector.extract_strided_slice %92 {offsets = [6, 0], sizes = [1, 16], strides = [1, 1]} : vector<8x16xf32> to vector<1x16xf32>
    %209 = vector.broadcast %207 : vector<8x1xf32> to vector<8x16xf32>
    %210 = vector.broadcast %208 : vector<1x16xf32> to vector<8x16xf32>
    %211 = arith.mulf %209, %210 : vector<8x16xf32>
    %212 = arith.addf %206, %211 : vector<8x16xf32>
    %213 = vector.extract_strided_slice %95 {offsets = [0, 19], sizes = [8, 1], strides = [1, 1]} : vector<8x24xf32> to vector<8x1xf32>
    %214 = vector.extract_strided_slice %93 {offsets = [6, 0], sizes = [1, 16], strides = [1, 1]} : vector<8x16xf32> to vector<1x16xf32>
    %215 = vector.broadcast %213 : vector<8x1xf32> to vector<8x16xf32>
    %216 = vector.broadcast %214 : vector<1x16xf32> to vector<8x16xf32>
    %217 = arith.mulf %215, %216 : vector<8x16xf32>
    %218 = arith.addf %212, %217 : vector<8x16xf32>
    %219 = vector.extract_strided_slice %95 {offsets = [0, 20], sizes = [8, 1], strides = [1, 1]} : vector<8x24xf32> to vector<8x1xf32>
    %220 = vector.extract_strided_slice %94 {offsets = [6, 0], sizes = [1, 16], strides = [1, 1]} : vector<8x16xf32> to vector<1x16xf32>
    %221 = vector.broadcast %219 : vector<8x1xf32> to vector<8x16xf32>
    %222 = vector.broadcast %220 : vector<1x16xf32> to vector<8x16xf32>
    %223 = arith.mulf %221, %222 : vector<8x16xf32>
    %224 = arith.addf %218, %223 : vector<8x16xf32>
    %225 = vector.extract_strided_slice %95 {offsets = [0, 21], sizes = [8, 1], strides = [1, 1]} : vector<8x24xf32> to vector<8x1xf32>
    %226 = vector.extract_strided_slice %92 {offsets = [7, 0], sizes = [1, 16], strides = [1, 1]} : vector<8x16xf32> to vector<1x16xf32>
    %227 = vector.broadcast %225 : vector<8x1xf32> to vector<8x16xf32>
    %228 = vector.broadcast %226 : vector<1x16xf32> to vector<8x16xf32>
    %229 = arith.mulf %227, %228 : vector<8x16xf32>
    %230 = arith.addf %224, %229 : vector<8x16xf32>
    %231 = vector.extract_strided_slice %95 {offsets = [0, 22], sizes = [8, 1], strides = [1, 1]} : vector<8x24xf32> to vector<8x1xf32>
    %232 = vector.extract_strided_slice %93 {offsets = [7, 0], sizes = [1, 16], strides = [1, 1]} : vector<8x16xf32> to vector<1x16xf32>
    %233 = vector.broadcast %231 : vector<8x1xf32> to vector<8x16xf32>
    %234 = vector.broadcast %232 : vector<1x16xf32> to vector<8x16xf32>
    %235 = arith.mulf %233, %234 : vector<8x16xf32>
    %236 = arith.addf %230, %235 : vector<8x16xf32>
    %237 = vector.extract_strided_slice %95 {offsets = [0, 23], sizes = [8, 1], strides = [1, 1]} : vector<8x24xf32> to vector<8x1xf32>
    %238 = vector.extract_strided_slice %94 {offsets = [7, 0], sizes = [1, 16], strides = [1, 1]} : vector<8x16xf32> to vector<1x16xf32>
    %239 = vector.broadcast %237 : vector<8x1xf32> to vector<8x16xf32>
    %240 = vector.broadcast %238 : vector<1x16xf32> to vector<8x16xf32>
    %241 = arith.mulf %239, %240 : vector<8x16xf32>
    %242 = arith.addf %236, %241 : vector<8x16xf32>
    %cst_14 = arith.constant 0.000000e+00 : f32
    %243 = vector.broadcast %cst_14 : f32 to vector<8x16xf32>
    %244 = arith.maximumf %242, %243 : vector<8x16xf32>
    %c0_15 = arith.constant 0 : index
    %c0_16 = arith.constant 0 : index
    %c0_17 = arith.constant 0 : index
    %245 = vector.load %arg8[%c0_15, %c0_16, %c0_17] : memref<1x8x16xf32, #tpu.memory_space<vmem>>, vector<1x8x16xf32>
    %246 = vector.shape_cast %245 : vector<1x8x16xf32> to vector<8x16xf32>
    %247 = vector.shape_cast %244 : vector<8x16xf32> to vector<1x8x16xf32>
    tpu.vector_store %arg8[%c0_15, %c0_16, %c0_17], %247 {strides = array<i32>} : memref<1x8x16xf32, #tpu.memory_space<vmem>>, vector<1x8x16xf32>,
    return
  }
  func.func @transform_0(%arg0: i32) -> (i32, i32, i32) {
    %c0_i32 = arith.constant 0 : i32
    %c0_i32_0 = arith.constant 0 : i32
    %c0_i32_1 = arith.constant 0 : i32
    return %arg0, %c0_i32, %c0_i32_0 : i32, i32, i32
  }
  func.func @transform_1(%arg0: i32) -> (i32, i32) {
    %c0_i32 = arith.constant 0 : i32
    %c0_i32_0 = arith.constant 0 : i32
    %c0_i32_1 = arith.constant 0 : i32
    return %c0_i32, %c0_i32_0 : i32, i32
  }
  func.func @transform_2(%arg0: i32) -> (i32, i32) {
    %c0_i32 = arith.constant 0 : i32
    %c0_i32_0 = arith.constant 0 : i32
    %c0_i32_1 = arith.constant 0 : i32
    return %c0_i32, %c0_i32_0 : i32, i32
  }
  func.func @transform_3(%arg0: i32) -> (i32, i32) {
    %c0_i32 = arith.constant 0 : i32
    %c0_i32_0 = arith.constant 0 : i32
    %c0_i32_1 = arith.constant 0 : i32
    return %c0_i32, %c0_i32_0 : i32, i32
  }
  func.func @transform_4(%arg0: i32) -> (i32, i32) {
    %c0_i32 = arith.constant 0 : i32
    %c0_i32_0 = arith.constant 0 : i32
    %c0_i32_1 = arith.constant 0 : i32
    return %c0_i32, %c0_i32_0 : i32, i32
  }
  func.func @transform_5(%arg0: i32) -> (i32, i32) {
    %c0_i32 = arith.constant 0 : i32
    %c0_i32_0 = arith.constant 0 : i32
    %c0_i32_1 = arith.constant 0 : i32
    return %c0_i32, %c0_i32_0 : i32, i32
  }
  func.func @transform_6(%arg0: i32) -> (i32, i32) {
    %c0_i32 = arith.constant 0 : i32
    %c0_i32_0 = arith.constant 0 : i32
    %c0_i32_1 = arith.constant 0 : i32
    return %c0_i32, %c0_i32_0 : i32, i32
  }
  func.func @transform_7(%arg0: i32) -> (i32, i32, i32) {
    %c0_i32 = arith.constant 0 : i32
    %c0_i32_0 = arith.constant 0 : i32
    %c0_i32_1 = arith.constant 0 : i32
    return %arg0, %c0_i32, %c0_i32_0 : i32, i32, i32
  }
}

</mosaic_0001>

<llo_original>
// kernel: block_forward.1
$region0: #{block_forward.1}
  #allocation0 [shape = 'u32[]', space=smem, size = 0x4, offset = 0x4, fixed_abs, tag = 'smem constant byte address 0x4 - core index']
  #allocation1 [shape = 'u32[144,128]{1,0:T(1,128)}', space=vmem, size = 0x12000, scoped, tag = 'internal scratch']
  %s0 = inlined_call_operand.vmem [shape: f32[2,4,18], index: 0, kind: input, shape index: {}]
  %s1 = inlined_call_operand.vmem [shape: f32[4,1], index: 1, kind: input, shape index: {}]
  %s2 = inlined_call_operand.vmem [shape: f32[4,1], index: 2, kind: input, shape index: {}]
  %s3 = inlined_call_operand.vmem [shape: f32[8,12], index: 3, kind: input, shape index: {}]
  %s4 = inlined_call_operand.vmem [shape: f32[8,1], index: 4, kind: input, shape index: {}]
  %s5 = inlined_call_operand.vmem [shape: f32[8,24], index: 5, kind: input, shape index: {}]
  %s6 = inlined_call_operand.vmem [shape: f32[8,1], index: 6, kind: input, shape index: {}]
  %s7 = inlined_call_operand.hbm [shape: f32[2,8,16], index: 7, kind: output, shape index: {}]
  %s8 = sld [smem:[#allocation0]]
  $region61: #{block_forward.1} parent=0
    _
  %s10 = ssub.s32 1, %s8
  %s11 = scalar_select 0, %s10, %s8
  $region1: #{block_forward.1} parent=0
    #allocation2 [shape = 'u8[8192]{0}', space=vmem, size = 0x2000, scoped, tag = 'output window, operand 0']
    #allocation3 [shape = 's32[2]{0}', space=sflag, size = 0x8, scoped, tag = 'scoped memory for block_forward.1']
    %12 = vsyncpa [#allocation3], 0
    %s13 = scalar_lea.sflag [#allocation3], 1
    %14 = vsyncpa %s13, 0
    loop: start=0, step=1, limit=4
    $region2: #{block_forward.1} parent=1 // loop_pre_header
      _
    $region3: #{block_forward.1} parent=1 // loop_header
      %s16 = sphi 0, %s20
      %p17 = scmp.ge.s32.totalorder %s16, 4
      %s26 = sphi 0, %s28
      %s29 = sphi 0, %s26
      %s30 = sphi 0, %s29
      %s46 = sphi 0, %s30
      %s50 = sphi 0, %s50
      %s52 = sphi 0, %s50
      %s53 = sphi 0, %s52
      %s67 = sphi 0, %s53
      %s71 = sphi 0, %s71
      %s73 = sphi 0, %s71
      %s74 = sphi 0, %s73
      %s88 = sphi 0, %s74
      %s92 = sphi 0, %s92
      %s94 = sphi 0, %s92
      %s95 = sphi 0, %s94
      %s109 = sphi 0, %s95
      %s113 = sphi 0, %s113
      %s115 = sphi 0, %s113
      %s116 = sphi 0, %s115
      %s130 = sphi 0, %s116
      %s134 = sphi 0, %s134
      %s136 = sphi 0, %s134
      %s137 = sphi 0, %s136
      %s151 = sphi 0, %s137
      %s155 = sphi 0, %s155
      %s157 = sphi 0, %s155
      %s158 = sphi 0, %s157
      %s172 = sphi 0, %s158
      %s178 = sphi 0, %s180
      %s181 = sphi 0, %s178
      %s182 = sphi 0, %s181
      %s198 = sphi 0, %s182
    $region4: #{block_forward.1} parent=1 // loop_header_branch
      %19 = sbr.rel (%p17) target = $region8
    $region5: #{block_forward.1} parent=1 // loop_body
      %s21 = ssub.s32 %s16, 1
      %s22 = ssub.s32 %s16, 2
      %s23 = sadd.s32 %s16, 1
      %s24 = ssub.s32 %s16, %s23
      %p25 = scmp.eq.s32.totalorder %s24, 0
      %s27 = sadd.s32 %s26, 1
      %s28 = scalar_select %p25, %s26, %s27
      %p31 = pneg %p25
      %p32 = scmp.eq.s32.totalorder %s16, 1
      %p33 = por %p31, %p32
      %p34 = scmp.ne.s32.totalorder %s26, %s29
      %p35 = scmp.eq.s32.totalorder %s16, 0
      %p36 = por %p34, %p35
      %p37 = scmp.ne.s32.totalorder %s26, %s29
      %p38 = scmp.eq.s32.totalorder %s21, 1
      %p39 = por %p37, %p38
      %p40 = scmp.ne.s32.totalorder %s29, %s30
      %p41 = scmp.eq.s32.totalorder %s21, 0
      %p42 = por %p40, %p41
      %p43 = scmp.ne.s32.totalorder %s29, %s30
      %p44 = scmp.eq.s32.totalorder %s22, 1
      %p45 = por %p43, %p44
      %p47 = scmp.ne.s32.totalorder %s30, %s46
      %p48 = scmp.eq.s32.totalorder %s22, 0
      %p49 = por %p47, %p48
      %s51 = sadd.s32 %s50, 1
      %p54 = scmp.eq.s32.totalorder %s16, 1
      %p55 = scmp.ne.s32.totalorder %s50, %s52
      %p56 = scmp.eq.s32.totalorder %s16, 0
      %p57 = por %p55, %p56
      %p58 = scmp.ne.s32.totalorder %s50, %s52
      %p59 = scmp.eq.s32.totalorder %s21, 1
      %p60 = por %p58, %p59
      %p61 = scmp.ne.s32.totalorder %s52, %s53
      %p62 = scmp.eq.s32.totalorder %s21, 0
      %p63 = por %p61, %p62
      %p64 = scmp.ne.s32.totalorder %s52, %s53
      %p65 = scmp.eq.s32.totalorder %s22, 1
      %p66 = por %p64, %p65
      %p68 = scmp.ne.s32.totalorder %s53, %s67
      %p69 = scmp.eq.s32.totalorder %s22, 0
      %p70 = por %p68, %p69
      %s72 = sadd.s32 %s71, 1
      %p75 = scmp.eq.s32.totalorder %s16, 1
      %p76 = scmp.ne.s32.totalorder %s71, %s73
      %p77 = scmp.eq.s32.totalorder %s16, 0
      %p78 = por %p76, %p77
      %p79 = scmp.ne.s32.totalorder %s71, %s73
      %p80 = scmp.eq.s32.totalorder %s21, 1
      %p81 = por %p79, %p80
      %p82 = scmp.ne.s32.totalorder %s73, %s74
      %p83 = scmp.eq.s32.totalorder %s21, 0
      %p84 = por %p82, %p83
      %p85 = scmp.ne.s32.totalorder %s73, %s74
      %p86 = scmp.eq.s32.totalorder %s22, 1
      %p87 = por %p85, %p86
      %p89 = scmp.ne.s32.totalorder %s74, %s88
      %p90 = scmp.eq.s32.totalorder %s22, 0
      %p91 = por %p89, %p90
      %s93 = sadd.s32 %s92, 1
      %p96 = scmp.eq.s32.totalorder %s16, 1
      %p97 = scmp.ne.s32.totalorder %s92, %s94
      %p98 = scmp.eq.s32.totalorder %s16, 0
      %p99 = por %p97, %p98
      %p100 = scmp.ne.s32.totalorder %s92, %s94
      %p101 = scmp.eq.s32.totalorder %s21, 1
      %p102 = por %p100, %p101
      %p103 = scmp.ne.s32.totalorder %s94, %s95
      %p104 = scmp.eq.s32.totalorder %s21, 0
      %p105 = por %p103, %p104
      %p106 = scmp.ne.s32.totalorder %s94, %s95
      %p107 = scmp.eq.s32.totalorder %s22, 1
      %p108 = por %p106, %p107
      %p110 = scmp.ne.s32.totalorder %s95, %s109
      %p111 = scmp.eq.s32.totalorder %s22, 0
      %p112 = por %p110, %p111
      %s114 = sadd.s32 %s113, 1
      %p117 = scmp.eq.s32.totalorder %s16, 1
      %p118 = scmp.ne.s32.totalorder %s113, %s115
      %p119 = scmp.eq.s32.totalorder %s16, 0
      %p120 = por %p118, %p119
      %p121 = scmp.ne.s32.totalorder %s113, %s115
      %p122 = scmp.eq.s32.totalorder %s21, 1
      %p123 = por %p121, %p122
      %p124 = scmp.ne.s32.totalorder %s115, %s116
      %p125 = scmp.eq.s32.totalorder %s21, 0
      %p126 = por %p124, %p125
      %p127 = scmp.ne.s32.totalorder %s115, %s116
      %p128 = scmp.eq.s32.totalorder %s22, 1
      %p129 = por %p127, %p128
      %p131 = scmp.ne.s32.totalorder %s116, %s130
      %p132 = scmp.eq.s32.totalorder %s22, 0
      %p133 = por %p131, %p132
      %s135 = sadd.s32 %s134, 1
      %p138 = scmp.eq.s32.totalorder %s16, 1
      %p139 = scmp.ne.s32.totalorder %s134, %s136
      %p140 = scmp.eq.s32.totalorder %s16, 0
      %p141 = por %p139, %p140
      %p142 = scmp.ne.s32.totalorder %s134, %s136
      %p143 = scmp.eq.s32.totalorder %s21, 1
      %p144 = por %p142, %p143
      %p145 = scmp.ne.s32.totalorder %s136, %s137
      %p146 = scmp.eq.s32.totalorder %s21, 0
      %p147 = por %p145, %p146
      %p148 = scmp.ne.s32.totalorder %s136, %s137
      %p149 = scmp.eq.s32.totalorder %s22, 1
      %p150 = por %p148, %p149
      %p152 = scmp.ne.s32.totalorder %s137, %s151
      %p153 = scmp.eq.s32.totalorder %s22, 0
      %p154 = por %p152, %p153
      %s156 = sadd.s32 %s155, 1
      %p159 = scmp.eq.s32.totalorder %s16, 1
      %p160 = scmp.ne.s32.totalorder %s155, %s157
      %p161 = scmp.eq.s32.totalorder %s16, 0
      %p162 = por %p160, %p161
      %p163 = scmp.ne.s32.totalorder %s155, %s157
      %p164 = scmp.eq.s32.totalorder %s21, 1
      %p165 = por %p163, %p164
      %p166 = scmp.ne.s32.totalorder %s157, %s158
      %p167 = scmp.eq.s32.totalorder %s21, 0
      %p168 = por %p166, %p167
      %p169 = scmp.ne.s32.totalorder %s157, %s158
      %p170 = scmp.eq.s32.totalorder %s22, 1
      %p171 = por %p169, %p170
      %p173 = scmp.ne.s32.totalorder %s158, %s172
      %p174 = scmp.eq.s32.totalorder %s22, 0
      %p175 = por %p173, %p174
      %s176 = ssub.s32 %s16, %s23
      %p177 = scmp.eq.s32.totalorder %s176, 0
      %s179 = sadd.s32 %s178, 1
      %s180 = scalar_select %p177, %s178, %s179
      %p183 = pneg %p177
      %p184 = scmp.eq.s32.totalorder %s16, 1
      %p185 = por %p183, %p184
      %p186 = scmp.ne.s32.totalorder %s178, %s181
      %p187 = scmp.eq.s32.totalorder %s16, 0
      %p188 = por %p186, %p187
      %p189 = scmp.ne.s32.totalorder %s178, %s181
      %p190 = scmp.eq.s32.totalorder %s21, 1
      %p191 = por %p189, %p190
      %p192 = scmp.ne.s32.totalorder %s181, %s182
      %p193 = scmp.eq.s32.totalorder %s21, 0
      %p194 = por %p192, %p193
      %p195 = scmp.ne.s32.totalorder %s181, %s182
      %p196 = scmp.eq.s32.totalorder %s22, 1
      %p197 = por %p195, %p196
      %p199 = scmp.ne.s32.totalorder %s182, %s198
      %p200 = scmp.eq.s32.totalorder %s22, 0
      %p201 = por %p199, %p200
      %p202 = scmp.le.s32.totalorder 1, %s16
      %p203 = scmp.lt.s32.totalorder %s16, 3
      %p204 = pnand %p202, %p203
      %p205 = pneg %p204
      // Predicated region
      $region9: #{block_forward.1} parent=5 // pred_check
        _
      $region10: #{block_forward.1} parent=5 // pred_check_branch
        %207 = sbr.rel (%p204) target = $region12
      $region11: #{block_forward.1} parent=5 // pred_region
        %s208 = ssub.s32 %s16, 1
        // Predicated region
        $region13: #{block_forward.1} parent=11 // pred_check
          %p209 = pneg %p63
        $region14: #{block_forward.1} parent=11 // pred_check_branch
          %211 = sbr.rel (%p209) target = $region16
        $region15: #{block_forward.1} parent=11 // pred_region
          _
        $region16: #{block_forward.1} parent=11 // pred_fallthru
          _
        // Predicated region
        $region17: #{block_forward.1} parent=11 // pred_check
          %p212 = pneg %p84
        $region18: #{block_forward.1} parent=11 // pred_check_branch
          %214 = sbr.rel (%p212) target = $region20
        $region19: #{block_forward.1} parent=11 // pred_region
          _
        $region20: #{block_forward.1} parent=11 // pred_fallthru
          _
        // Predicated region
        $region21: #{block_forward.1} parent=11 // pred_check
          %p215 = pneg %p105
        $region22: #{block_forward.1} parent=11 // pred_check_branch
          %217 = sbr.rel (%p215) target = $region24
        $region23: #{block_forward.1} parent=11 // pred_region
          _
        $region24: #{block_forward.1} parent=11 // pred_fallthru
          _
        // Predicated region
        $region25: #{block_forward.1} parent=11 // pred_check
          %p218 = pneg %p126
        $region26: #{block_forward.1} parent=11 // pred_check_branch
          %220 = sbr.rel (%p218) target = $region28
        $region27: #{block_forward.1} parent=11 // pred_region
          _
        $region28: #{block_forward.1} parent=11 // pred_fallthru
          _
        // Predicated region
        $region29: #{block_forward.1} parent=11 // pred_check
          %p221 = pneg %p147
        $region30: #{block_forward.1} parent=11 // pred_check_branch
          %223 = sbr.rel (%p221) target = $region32
        $region31: #{block_forward.1} parent=11 // pred_region
          _
        $region32: #{block_forward.1} parent=11 // pred_fallthru
          _
        // Predicated region
        $region33: #{block_forward.1} parent=11 // pred_check
          %p224 = pneg %p168
        $region34: #{block_forward.1} parent=11 // pred_check_branch
          %226 = sbr.rel (%p224) target = $region36
        $region35: #{block_forward.1} parent=11 // pred_region
          _
        $region36: #{block_forward.1} parent=11 // pred_fallthru
          _
      $region12: #{block_forward.1} parent=5 // pred_fallthru
        _
      %p227 = scmp.lt.s32.totalorder %s16, 2
      // Predicated region
      $region37: #{block_forward.1} parent=5 // pred_check
        %p228 = pneg %p227
      $region38: #{block_forward.1} parent=5 // pred_check_branch
        %230 = sbr.rel (%p228) target = $region40
      $region39: #{block_forward.1} parent=5 // pred_region
        // Predicated region
        $region41: #{block_forward.1} parent=39 // pred_check
          %p231 = pneg %p36
        $region42: #{block_forward.1} parent=39 // pred_check_branch
          %233 = sbr.rel (%p231) target = $region44
        $region43: #{block_forward.1} parent=39 // pred_region
          %p234 = scmp.lt.s32.totalorder %s16, 1
          %s235 = scalar_select %p234, %s16, 1
          %s236 = smul.addr %s235, 4
          %s237 = scalar_lea.vmem %s0, %s236
        $region44: #{block_forward.1} parent=39 // pred_fallthru
          _
      $region40: #{block_forward.1} parent=5 // pred_fallthru
        _
      %p238 = scmp.le.s32.totalorder 1, %s16
      %p239 = scmp.lt.s32.totalorder %s16, 3
      %p240 = pnand %p238, %p239
      %p241 = pneg %p240
      // Predicated region
      $region45: #{block_forward.1} parent=5 // pred_check
        _
      $region46: #{block_forward.1} parent=5 // pred_check_branch
        %243 = sbr.rel (%p240) target = $region48
      $region47: #{block_forward.1} parent=5 // pred_region
        %s244 = ssub.s32 %s16, 1
        %p245 = scmp.lt.s32.totalorder %s21, 1
        %s246 = scalar_select %p245, %s21, 1
        %s247 = smul.addr %s246, 4
        %s248 = scalar_lea.vmem %s0, %s247
        %p249 = pneg %p42
        %p250 = pneg %p39
        %p251 = pneg %p63
        %p252 = pneg %p60
        %p253 = pneg %p84
        %p254 = pneg %p81
        %p255 = pneg %p105
        %p256 = pneg %p102
        %p257 = pneg %p126
        %p258 = pneg %p123
        %p259 = pneg %p147
        %p260 = pneg %p144
        %p261 = pneg %p168
        %p262 = pneg %p165
        %p263 = pneg %p194
        %p264 = pneg %p191
        %s265 = sand.u32 %s181, 1
        %s266 = scalar_lea.sflag [#allocation3], %s265
        %s267 = sand.u32 %s181, 1
        %s268 = smul.addr %s267, 8
        %s269 = scalar_lea.vmem [#allocation2], %s268
        %p270 = scmp.lt.s32.totalorder %s21, 1
        %s271 = scalar_select %p270, %s21, 1
        %s272 = smul.addr %s271, 4
        %s273 = scalar_lea.vmem %s0, %s272
        %v274 = vld [vmem:[%s273] sm:$0xf]
        %v275 = vld [vmem:[%s1] sm:$0xf]
        %277 = vset.pattern.permute.xlu0 0
        %278 = vperm.xlu0 %277, %v275
        %v279 = vpop.permute.xlu0 %278
        %v281 = vmul.f32 %v274, %v279
        %v282 = vld [vmem:[%s2] sm:$0xf]
        %284 = vset.pattern.permute.xlu0 0
        %285 = vperm.xlu0 %284, %v282
        %v286 = vpop.permute.xlu0 %285
        %v288 = vadd.f32 %v281, %v286
        %v289 = vld [vmem:[%s3] sm:$0xff]
        %v290 = vld [vmem:[%s4] sm:$0xff]
        %292 = vset.pattern.permute.xlu0 0
        %293 = vperm.xlu0 %292, %v290
        %v294 = vpop.permute.xlu0 %293
        %297 = vset.pattern.permute.xlu0 0
        %298 = vperm.xlu0 %297, %v289
        %v299 = vpop.permute.xlu0 %298
        %v301 = vlaneseq
        %v302 = vshrl.u32 %v301, 7
        %v303 = vsub.s32 0, %v302
        %v304 = vrot.slane %v288, %v303
        %v305 = vmul.f32 %v299, %v304
        %v306 = vadd.f32 %v294, %v305
        %307 = vset.pattern.permute.xlu0 1
        %308 = vperm.xlu0 %307, %v289
        %v309 = vpop.permute.xlu0 %308
        %v311 = vmul.f32 %v309, %v304
        %313 = vrot.lane.b32.xlu0 %v311, 127
        %v314 = vpop.permute.xlu0 %313
        %v316 = vadd.f32 %v306, %v314
        %317 = vset.pattern.permute.xlu0 2
        %318 = vperm.xlu0 %317, %v289
        %v319 = vpop.permute.xlu0 %318
        %v321 = vmul.f32 %v319, %v304
        %323 = vrot.lane.b32.xlu0 %v321, 126
        %v324 = vpop.permute.xlu0 %323
        %v326 = vadd.f32 %v316, %v324
        %327 = vset.pattern.permute.xlu0 3
        %328 = vperm.xlu0 %327, %v289
        %v329 = vpop.permute.xlu0 %328
        %v331 = vlaneseq
        %v332 = vshrl.u32 %v331, 7
        %v333 = vsub.s32 1, %v332
        %v334 = vrot.slane %v288, %v333
        %v335 = vmul.f32 %v329, %v334
        %v336 = vadd.f32 %v326, %v335
        %337 = vset.pattern.permute.xlu0 4
        %338 = vperm.xlu0 %337, %v289
        %v339 = vpop.permute.xlu0 %338
        %v341 = vmul.f32 %v339, %v334
        %343 = vrot.lane.b32.xlu0 %v341, 127
        %v344 = vpop.permute.xlu0 %343
        %v346 = vadd.f32 %v336, %v344
        %347 = vset.pattern.permute.xlu0 5
        %348 = vperm.xlu0 %347, %v289
        %v349 = vpop.permute.xlu0 %348
        %v351 = vmul.f32 %v349, %v334
        %353 = vrot.lane.b32.xlu0 %v351, 126
        %v354 = vpop.permute.xlu0 %353
        %v356 = vadd.f32 %v346, %v354
        %357 = vset.pattern.permute.xlu0 6
        %358 = vperm.xlu0 %357, %v289
        %v359 = vpop.permute.xlu0 %358
        %v361 = vlaneseq
        %v362 = vshrl.u32 %v361, 7
        %v363 = vsub.s32 2, %v362
        %v364 = vrot.slane %v288, %v363
        %v365 = vmul.f32 %v359, %v364
        %v366 = vadd.f32 %v356, %v365
        %367 = vset.pattern.permute.xlu0 7
        %368 = vperm.xlu0 %367, %v289
        %v369 = vpop.permute.xlu0 %368
        %v371 = vmul.f32 %v369, %v364
        %373 = vrot.lane.b32.xlu0 %v371, 127
        %v374 = vpop.permute.xlu0 %373
        %v376 = vadd.f32 %v366, %v374
        %377 = vset.pattern.permute.xlu0 8
        %378 = vperm.xlu0 %377, %v289
        %v379 = vpop.permute.xlu0 %378
        %v381 = vmul.f32 %v379, %v364
        %383 = vrot.lane.b32.xlu0 %v381, 126
        %v384 = vpop.permute.xlu0 %383
        %v386 = vadd.f32 %v376, %v384
        %387 = vset.pattern.permute.xlu0 9
        %388 = vperm.xlu0 %387, %v289
        %v389 = vpop.permute.xlu0 %388
        %v391 = vlaneseq
        %v392 = vshrl.u32 %v391, 7
        %v393 = vsub.s32 3, %v392
        %v394 = vrot.slane %v288, %v393
        %v395 = vmul.f32 %v389, %v394
        %v396 = vadd.f32 %v386, %v395
        %397 = vset.pattern.permute.xlu0 10
        %398 = vperm.xlu0 %397, %v289
        %v399 = vpop.permute.xlu0 %398
        %v401 = vmul.f32 %v399, %v394
        %403 = vrot.lane.b32.xlu0 %v401, 127
        %v404 = vpop.permute.xlu0 %403
        %v406 = vadd.f32 %v396, %v404
        %407 = vset.pattern.permute.xlu0 11
        %408 = vperm.xlu0 %407, %v289
        %v409 = vpop.permute.xlu0 %408
        %v411 = vmul.f32 %v409, %v394
        %413 = vrot.lane.b32.xlu0 %v411, 126
        %v414 = vpop.permute.xlu0 %413
        %v416 = vadd.f32 %v406, %v414
        %v417 = vmax.f32 %v416, 0.0
        %419 = vrot.lane.b32.xlu0 %v417, 1
        %v420 = vpop.permute.xlu0 %419
        %422 = vrot.lane.b32.xlu0 %v417, 2
        %v423 = vpop.permute.xlu0 %422
        %vm425 = vcmask 7168
        %v426 = vsel %vm425, %v417, %v420
        %vm427 = vcmask 138240
        %v428 = vsel %vm427, %v426, %v423
        %v429 = vld [vmem:[%s5] sm:$0xff]
        %v430 = vld [vmem:[%s6] sm:$0xff]
        %432 = vset.pattern.permute.xlu0 0
        %433 = vperm.xlu0 %432, %v430
        %v434 = vpop.permute.xlu0 %433
        %437 = vset.pattern.permute.xlu0 0
        %438 = vperm.xlu0 %437, %v429
        %v439 = vpop.permute.xlu0 %438
        %v441 = vlaneseq
        %v442 = vshrl.u32 %v441, 7
        %v443 = vsub.s32 0, %v442
        %v444 = vrot.slane %v428, %v443
        %v445 = vmul.f32 %v439, %v444
        %v446 = vadd.f32 %v434, %v445
        %447 = vset.pattern.permute.xlu0 1
        %448 = vperm.xlu0 %447, %v429
        %v449 = vpop.permute.xlu0 %448
        %v451 = vmul.f32 %v449, %v444
        %453 = vrot.lane.b32.xlu0 %v451, 127
        %v454 = vpop.permute.xlu0 %453
        %v456 = vadd.f32 %v446, %v454
        %457 = vset.pattern.permute.xlu0 2
        %458 = vperm.xlu0 %457, %v429
        %v459 = vpop.permute.xlu0 %458
        %v461 = vmul.f32 %v459, %v444
        %463 = vrot.lane.b32.xlu0 %v461, 126
        %v464 = vpop.permute.xlu0 %463
        %v466 = vadd.f32 %v456, %v464
        %467 = vset.pattern.permute.xlu0 3
        %468 = vperm.xlu0 %467, %v429
        %v469 = vpop.permute.xlu0 %468
        %v471 = vlaneseq
        %v472 = vshrl.u32 %v471, 7
        %v473 = vsub.s32 1, %v472
        %v474 = vrot.slane %v428, %v473
        %v475 = vmul.f32 %v469, %v474
        %v476 = vadd.f32 %v466, %v475
        %477 = vset.pattern.permute.xlu0 4
        %478 = vperm.xlu0 %477, %v429
        %v479 = vpop.permute.xlu0 %478
        %v481 = vmul.f32 %v479, %v474
        %483 = vrot.lane.b32.xlu0 %v481, 127
        %v484 = vpop.permute.xlu0 %483
        %v486 = vadd.f32 %v476, %v484
        %487 = vset.pattern.permute.xlu0 5
        %488 = vperm.xlu0 %487, %v429
        %v489 = vpop.permute.xlu0 %488
        %v491 = vmul.f32 %v489, %v474
        %493 = vrot.lane.b32.xlu0 %v491, 126
        %v494 = vpop.permute.xlu0 %493
        %v496 = vadd.f32 %v486, %v494
        %497 = vset.pattern.permute.xlu0 6
        %498 = vperm.xlu0 %497, %v429
        %v499 = vpop.permute.xlu0 %498
        %v501 = vlaneseq
        %v502 = vshrl.u32 %v501, 7
        %v503 = vsub.s32 2, %v502
        %v504 = vrot.slane %v428, %v503
        %v505 = vmul.f32 %v499, %v504
        %v506 = vadd.f32 %v496, %v505
        %507 = vset.pattern.permute.xlu0 7
        %508 = vperm.xlu0 %507, %v429
        %v509 = vpop.permute.xlu0 %508
        %v511 = vmul.f32 %v509, %v504
        %513 = vrot.lane.b32.xlu0 %v511, 127
        %v514 = vpop.permute.xlu0 %513
        %v516 = vadd.f32 %v506, %v514
        %517 = vset.pattern.permute.xlu0 8
        %518 = vperm.xlu0 %517, %v429
        %v519 = vpop.permute.xlu0 %518
        %v521 = vmul.f32 %v519, %v504
        %523 = vrot.lane.b32.xlu0 %v521, 126
        %v524 = vpop.permute.xlu0 %523
        %v526 = vadd.f32 %v516, %v524
        %527 = vset.pattern.permute.xlu0 9
        %528 = vperm.xlu0 %527, %v429
        %v529 = vpop.permute.xlu0 %528
        %v531 = vlaneseq
        %v532 = vshrl.u32 %v531, 7
        %v533 = vsub.s32 3, %v532
        %v534 = vrot.slane %v428, %v533
        %v535 = vmul.f32 %v529, %v534
        %v536 = vadd.f32 %v526, %v535
        %537 = vset.pattern.permute.xlu0 10
        %538 = vperm.xlu0 %537, %v429
        %v539 = vpop.permute.xlu0 %538
        %v541 = vmul.f32 %v539, %v534
        %543 = vrot.lane.b32.xlu0 %v541, 127
        %v544 = vpop.permute.xlu0 %543
        %v546 = vadd.f32 %v536, %v544
        %547 = vset.pattern.permute.xlu0 11
        %548 = vperm.xlu0 %547, %v429
        %v549 = vpop.permute.xlu0 %548
        %v551 = vmul.f32 %v549, %v534
        %553 = vrot.lane.b32.xlu0 %v551, 126
        %v554 = vpop.permute.xlu0 %553
        %v556 = vadd.f32 %v546, %v554
        %557 = vset.pattern.permute.xlu0 12
        %558 = vperm.xlu0 %557, %v429
        %v559 = vpop.permute.xlu0 %558
        %v561 = vlaneseq
        %v562 = vshrl.u32 %v561, 7
        %v563 = vsub.s32 4, %v562
        %v564 = vrot.slane %v428, %v563
        %v565 = vmul.f32 %v559, %v564
        %v566 = vadd.f32 %v556, %v565
        %567 = vset.pattern.permute.xlu0 13
        %568 = vperm.xlu0 %567, %v429
        %v569 = vpop.permute.xlu0 %568
        %v571 = vmul.f32 %v569, %v564
        %573 = vrot.lane.b32.xlu0 %v571, 127
        %v574 = vpop.permute.xlu0 %573
        %v576 = vadd.f32 %v566, %v574
        %577 = vset.pattern.permute.xlu0 14
        %578 = vperm.xlu0 %577, %v429
        %v579 = vpop.permute.xlu0 %578
        %v581 = vmul.f32 %v579, %v564
        %583 = vrot.lane.b32.xlu0 %v581, 126
        %v584 = vpop.permute.xlu0 %583
        %v586 = vadd.f32 %v576, %v584
        %587 = vset.pattern.permute.xlu0 15
        %588 = vperm.xlu0 %587, %v429
        %v589 = vpop.permute.xlu0 %588
        %v591 = vlaneseq
        %v592 = vshrl.u32 %v591, 7
        %v593 = vsub.s32 5, %v592
        %v594 = vrot.slane %v428, %v593
        %v595 = vmul.f32 %v589, %v594
        %v596 = vadd.f32 %v586, %v595
        %597 = vset.pattern.permute.xlu0 16
        %598 = vperm.xlu0 %597, %v429
        %v599 = vpop.permute.xlu0 %598
        %v601 = vmul.f32 %v599, %v594
        %603 = vrot.lane.b32.xlu0 %v601, 127
        %v604 = vpop.permute.xlu0 %603
        %v606 = vadd.f32 %v596, %v604
        %607 = vset.pattern.permute.xlu0 17
        %608 = vperm.xlu0 %607, %v429
        %v609 = vpop.permute.xlu0 %608
        %v611 = vmul.f32 %v609, %v594
        %613 = vrot.lane.b32.xlu0 %v611, 126
        %v614 = vpop.permute.xlu0 %613
        %v616 = vadd.f32 %v606, %v614
        %617 = vset.pattern.permute.xlu0 18
        %618 = vperm.xlu0 %617, %v429
        %v619 = vpop.permute.xlu0 %618
        %v621 = vlaneseq
        %v622 = vshrl.u32 %v621, 7
        %v623 = vsub.s32 6, %v622
        %v624 = vrot.slane %v428, %v623
        %v625 = vmul.f32 %v619, %v624
        %v626 = vadd.f32 %v616, %v625
        %627 = vset.pattern.permute.xlu0 19
        %628 = vperm.xlu0 %627, %v429
        %v629 = vpop.permute.xlu0 %628
        %v631 = vmul.f32 %v629, %v624
        %633 = vrot.lane.b32.xlu0 %v631, 127
        %v634 = vpop.permute.xlu0 %633
        %v636 = vadd.f32 %v626, %v634
        %637 = vset.pattern.permute.xlu0 20
        %638 = vperm.xlu0 %637, %v429
        %v639 = vpop.permute.xlu0 %638
        %v641 = vmul.f32 %v639, %v624
        %643 = vrot.lane.b32.xlu0 %v641, 126
        %v644 = vpop.permute.xlu0 %643
        %v646 = vadd.f32 %v636, %v644
        %647 = vset.pattern.permute.xlu0 21
        %648 = vperm.xlu0 %647, %v429
        %v649 = vpop.permute.xlu0 %648
        %v651 = vlaneseq
        %v652 = vshrl.u32 %v651, 7
        %v653 = vsub.s32 7, %v652
        %v654 = vrot.slane %v428, %v653
        %v655 = vmul.f32 %v649, %v654
        %v656 = vadd.f32 %v646, %v655
        %657 = vset.pattern.permute.xlu0 22
        %658 = vperm.xlu0 %657, %v429
        %v659 = vpop.permute.xlu0 %658
        %v661 = vmul.f32 %v659, %v654
        %663 = vrot.lane.b32.xlu0 %v661, 127
        %v664 = vpop.permute.xlu0 %663
        %v666 = vadd.f32 %v656, %v664
        %667 = vset.pattern.permute.xlu0 23
        %668 = vperm.xlu0 %667, %v429
        %v669 = vpop.permute.xlu0 %668
        %v671 = vmul.f32 %v669, %v654
        %673 = vrot.lane.b32.xlu0 %v671, 126
        %v674 = vpop.permute.xlu0 %673
        %v676 = vadd.f32 %v666, %v674
        %v677 = vmax.f32 %v676, 0.0
        %vm678 = vcmask 130048
        %679 = vst.msk [vmem:[%s269] sm:$0xff] %vm678, %v677
        %s680 = sand.u32 %s181, 1
        %s681 = scalar_lea.sflag [#allocation3], %s680
        %s682 = sand.u32 %s181, 1
        %s683 = smul.addr %s682, 8
        %s684 = scalar_lea.vmem [#allocation2], %s683
        // Predicated region
        $region49: #{block_forward.1} parent=47 // pred_check
          %p685 = pneg %p191
        $region50: #{block_forward.1} parent=47 // pred_check_branch
          %687 = sbr.rel (%p685) target = $region52
        $region51: #{block_forward.1} parent=47 // pred_region
          %s689 = ssub.s32 128, 128
          %690 = vsyncadd %s681, %s689
          %s691 = smul.addr %s21, 128
          %s692 = scalar_lea.hbm %s7, %s691
          %s694 = sshll.u32 %s684, 4
          %s695 = int_to_ptr.vmem [resolvable:$true] %s694
          %697 = dma.vmem_to_hbm [thread:$0]  %s695, 128, %s692, %s681
        $region52: #{block_forward.1} parent=47 // pred_fallthru
          _
      $region48: #{block_forward.1} parent=5 // pred_fallthru
        _
      %p698 = scmp.le.s32.totalorder 2, %s16
      // Predicated region
      $region53: #{block_forward.1} parent=5 // pred_check
        %p699 = pneg %p698
      $region54: #{block_forward.1} parent=5 // pred_check_branch
        %701 = sbr.rel (%p699) target = $region56
      $region55: #{block_forward.1} parent=5 // pred_region
        %s702 = ssub.s32 %s16, 2
        // Predicated region
        $region57: #{block_forward.1} parent=55 // pred_check
          %p703 = pneg %p197
        $region58: #{block_forward.1} parent=55 // pred_check_branch
          %705 = sbr.rel (%p703) target = $region60
        $region59: #{block_forward.1} parent=55 // pred_region
          %s706 = sand.u32 %s182, 1
          %s707 = scalar_lea.sflag [#allocation3], %s706
          %s708 = sand.u32 %s182, 1
          %s709 = smul.addr %s708, 8
          %s710 = scalar_lea.vmem [#allocation2], %s709
          %711 = dma.done %s707, 128
        $region60: #{block_forward.1} parent=55 // pred_fallthru
          _
      $region56: #{block_forward.1} parent=5 // pred_fallthru
        _
    $region6: #{block_forward.1} parent=1 // loop_footer
      %s20 = sadd.s32 1, %s16
    $region7: #{block_forward.1} parent=1 // loop_footer_branch
      %15 = sbr.rel target = $region3
    $region8: #{block_forward.1} parent=1 // loop_exit
      _
    %712 = vsyncpa [#allocation3], 1
    %s713 = scalar_lea.sflag [#allocation3], 1
    %714 = vsyncpa %s713, 1

</llo_original>
